<compile_context>
chip_gen: v7x
topology: tpu7x:2x2x1
jax: 0.10.0
libtpu: 0.0.40
codegen_flags: <defaults>
</compile_context>

<pallas_src>
import jax
import jax.numpy as jnp
from jax import lax
from jax.experimental import pallas as pl
from jax.experimental.pallas import tpu as pltpu


# ------------------------------ tiling helpers ------------------------------
def _pick_tile(dim, align, cap):
    """Largest multiple of `align` that divides `dim` and is <= cap, else `dim`."""
    if dim % align == 0:
        t = min(cap, dim)
        t -= t % align
        while t >= align:
            if dim % t == 0:
                return t
            t -= align
    return dim  # full extent (always a legal block)


def _pick_pool_row_tile(Ho, Wo, C, W2, itemsize):
    """Output-row tile for the 2x2 pool satisfying the (8, 128) block rules."""
    cap_bytes = 2 * 1024 * 1024          # per-block cap; VMEM-safe on every gen
    for t in (128, 64, 32, 16, 8):
        if t > Ho or Ho % t:
            continue
        if t % 8 or (t * Wo) % 128:
            continue
        if C * t * W2 * itemsize <= cap_bytes:
            return t
    return Ho  # whole image per batch element (full-extent block is always legal)


# --------------------------------- kernels ----------------------------------
def _conv_matmul_kernel(p_ref, w_ref, b_ref, o_ref, acc_ref):
    # p_ref:   (1, tk, tp) bf16  im2col patches tile (K-slice x spatial-slice)
    # w_ref:   (tn, tk)    bf16  weight tile
    # b_ref:   (tn, 1)     f32   bias column
    # o_ref:   (1, tn, tp)       output tile (NCHW layout, spatial on lanes)
    # acc_ref: (tn, tp)    f32   VMEM accumulator, lives across the K grid axis
    @pl.when(pl.program_id(3) == 0)
    def _init():
        acc_ref[...] = jnp.zeros_like(acc_ref)

    acc_ref[...] += jnp.dot(w_ref[...], p_ref[0],
                            preferred_element_type=jnp.float32)

    @pl.when(pl.program_id(3) == pl.num_programs(3) - 1)
    def _finalize():
        o_ref[0] = (acc_ref[...] + b_ref[...]).astype(o_ref.dtype)


def _avg_pool_kernel(x_ref, o_ref):
    # x_ref: (1, C, th, 2*W) -- lane j < W is row 2h, lane j >= W is row 2h+1
    # o_ref: (1, C, th*Wo)   -- flattened (Ho, Wo) spatial, lane-dense
    x = x_ref[0].astype(jnp.float32)
    C, th, W2 = x.shape
    W = W2 // 2
    Wo = W // 2
    rows = x[:, :, :W] + x[:, :, W:]                     # vertical 2x1 sum
    # Horizontal 1x2 sum (and /4) as a tiny matmul with a 0.25-valued selection
    # matrix: keeps everything on contiguous lanes, exact at HIGHEST precision.
    w_i = lax.broadcasted_iota(jnp.int32, (W, Wo), 0)
    o_i = lax.broadcasted_iota(jnp.int32, (W, Wo), 1)
    sel = jnp.where(w_i // 2 == o_i, 0.25, 0.0).astype(jnp.float32)
    pooled = jnp.dot(rows.reshape(C * th, W), sel,
                     preferred_element_type=jnp.float32,
                     precision=lax.Precision.HIGHEST)    # (C*th, Wo)
    o_ref[0] = pooled.reshape(C, th * Wo).astype(o_ref.dtype)


# ---------------------------------- module ----------------------------------
class Downsample:
    """JAX/Pallas port of the PyTorch Downsample module (dims=2 case)."""

    def __init__(self, channels, use_conv, dims=2, out_channels=None, key=None):
        assert dims == 2, "Only the 2D (default) case is implemented."
        # TODO(synk): dims=1 / dims=3 variants are not implemented (default is dims=2).
        self.channels = channels
        self.out_channels = out_channels or channels
        self.use_conv = use_conv
        self.dims = dims
        if use_conv:
            assert key is not None
            kw_key, kb_key = jax.random.split(key)
            # PyTorch Conv2d weight layout: (C_out, C_in, kH, kW)
            fan_in = channels * 3 * 3
            bound = 1.0 / (fan_in ** 0.5)
            self.w = jax.random.uniform(
                kw_key, (self.out_channels, channels, 3, 3),
                dtype=jnp.float32, minval=-bound, maxval=bound)
            self.b = jax.random.uniform(
                kb_key, (self.out_channels,), dtype=jnp.float32,
                minval=-bound, maxval=bound)
        else:
            assert self.channels == self.out_channels

    # ---- conv path: 3x3, stride 2, pad 1 ----
    def _conv(self, x):
        N, C, H, W = x.shape
        Ho = (H + 2 - 3) // 2 + 1
        Wo = (W + 2 - 3) // 2 + 1
        P, K = Ho * Wo, 9 * C
        Cout = self.out_channels

        # bf16 operands for the MXU (f32 accumulation inside the kernel).
        xb = x.astype(jnp.bfloat16)
        x_pad = jnp.pad(xb, ((0, 0), (0, 0), (1, 1), (1, 1)))
        # Channel-packed im2col in NCHW order: k = (kh*3 + kw)*C + ci, spatial on
        # the minor axis so it lands on TPU lanes.
        taps = [x_pad[:, :, kh::2, kw::2][:, :, :Ho, :Wo]
                for kh in range(3) for kw in range(3)]
        patches = jnp.stack(taps, axis=1).reshape(N, K, P)            # (N, K, P)

        # Weight matrix matching the patch ordering: (co, kh, kw, ci) -> (co, K)
        w_mat = (jnp.transpose(self.w, (0, 2, 3, 1))
                 .reshape(Cout, K).astype(jnp.bfloat16))
        b_col = self.b.reshape(Cout, 1).astype(jnp.float32)

        tn = _pick_tile(Cout, align=8, cap=256)    # output-channel tile
        tp = _pick_tile(P, align=128, cap=512)     # spatial tile (lane dim)
        tk = _pick_tile(K, align=128, cap=512)     # reduction tile

        grid = (N, Cout // tn, P // tp, K // tk)

        out_flat = pl.pallas_call(
            _conv_matmul_kernel,
            out_shape=jax.ShapeDtypeStruct((N, Cout, P), x.dtype),
            grid=grid,
            in_specs=[
                pl.BlockSpec((1, tk, tp), lambda n, c, p, k: (n, k, p)),
                pl.BlockSpec((tn, tk), lambda n, c, p, k: (c, k)),
                pl.BlockSpec((tn, 1), lambda n, c, p, k: (c, 0)),
            ],
            out_specs=pl.BlockSpec((1, tn, tp), lambda n, c, p, k: (n, c, p)),
            scratch_shapes=[pltpu.VMEM((tn, tp), jnp.float32)],
            compiler_params=pltpu.CompilerParams(
                dimension_semantics=("parallel", "parallel", "parallel",
                                     "arbitrary")),
        )(patches, w_mat, b_col)

        return out_flat.reshape(N, Cout, Ho, Wo)

    # ---- avg-pool path: kernel 2, stride 2 ----
    def _avg_pool(self, x):
        N, C, H, W = x.shape
        Ho, Wo = H // 2, W // 2
        if H % 2 or W % 2:            # PyTorch avg_pool2d(2, 2) floor behaviour
            x = x[:, :, :2 * Ho, :2 * Wo]
            H, W = 2 * Ho, 2 * Wo
        P = Ho * Wo
        # Free reshape of the contiguous NCHW tensor: each output row's two
        # source rows end up side by side on the lane axis -> no strided loads.
        x_pairs = x.reshape(N, C, Ho, 2 * W)

        th = _pick_pool_row_tile(Ho, Wo, C, 2 * W, x.dtype.itemsize)
        grid = (N, Ho // th)

        out_flat = pl.pallas_call(
            _avg_pool_kernel,
            out_shape=jax.ShapeDtypeStruct((N, C, P), x.dtype),
            grid=grid,
            in_specs=[pl.BlockSpec((1, C, th, 2 * W), lambda n, t: (n, 0, t, 0))],
            out_specs=pl.BlockSpec((1, C, th * Wo), lambda n, t: (n, 0, t)),
            compiler_params=pltpu.CompilerParams(
                dimension_semantics=("parallel", "parallel")),
        )(x_pairs)

        return out_flat.reshape(N, C, Ho, Wo)

    def __call__(self, x):
        assert x.shape[1] == self.channels
        return self._conv(x) if self.use_conv else self._avg_pool(x)


# ---------------------------- references (pure JAX) --------------------------
def _ref_conv(x, w, b):
    # The Pallas kernel feeds the MXU bf16 operands (f32 accumulation), so the
    # reference rounds the inputs identically before an f32 convolution.
    xb = x.astype(jnp.bfloat16).astype(jnp.float32)
    wb = w.astype(jnp.bfloat16).astype(jnp.float32)
    y = lax.conv_general_dilated(
        xb, wb, window_strides=(2, 2), padding=((1, 1), (1, 1)),
        dimension_numbers=("NCHW", "OIHW", "NCHW"),
        preferred_element_type=jnp.float32)
    return y + b.reshape(1, -1, 1, 1)


def _ref_avg_pool(x):
    N, C, H, W = x.shape
    return x.reshape(N, C, H // 2, 2, W // 2, 2).mean(axis=(3, 5))


if __name__ == "__main__":
    key = jax.random.PRNGKey(0)
    kx, kp = jax.random.split(key)

    N, C, H, W = 2, 4, 16, 16
    x = jax.random.normal(kx, (N, C, H, W), dtype=jnp.float32)

    # use_conv=True path (3x3 / stride 2 / pad 1 conv)
    ds_conv = Downsample(C, use_conv=True, dims=2, key=kp)
    y_conv = jax.block_until_ready(ds_conv(x))
    y_conv_ref = _ref_conv(x, ds_conv.w, ds_conv.b)
    assert y_conv.shape == (N, C, H // 2, W // 2), y_conv.shape
    assert jnp.allclose(y_conv, y_conv_ref, atol=1e-3, rtol=1e-3), (
        float(jnp.max(jnp.abs(y_conv - y_conv_ref))))

    # use_conv=False path (2x2 avg pool, stride 2)
    ds_pool = Downsample(C, use_conv=False, dims=2)
    y_pool = jax.block_until_ready(ds_pool(x))
    y_pool_ref = _ref_avg_pool(x)
    assert y_pool.shape == (N, C, H // 2, W // 2), y_pool.shape
    assert jnp.allclose(y_pool, y_pool_ref, atol=1e-4, rtol=1e-4), (
        float(jnp.max(jnp.abs(y_pool - y_pool_ref))))

    print("KERNEL_OK")
</pallas_src>

<mosaic_0001>
module attributes {stable_mosaic.version = 11 : i64} {
  func.func @_conv_matmul_kernel(%arg0: i32, %arg1: i32, %arg2: i32, %arg3: i32, %arg4: memref<1x36x64xbf16, #tpu.memory_space<vmem>>, %arg5: memref<4x36xbf16, #tpu.memory_space<vmem>>, %arg6: memref<4x1xf32, #tpu.memory_space<vmem>>, %arg7: memref<1x4x64xf32, #tpu.memory_space<vmem>>, %arg8: memref<4x64xf32, #tpu.memory_space<vmem>>) attributes {dimension_semantics = [#tpu.dimension_semantics<parallel>, #tpu.dimension_semantics<parallel>, #tpu.dimension_semantics<parallel>, #tpu.dimension_semantics<arbitrary>], iteration_bounds = array<i64: 2, 1, 1, 1>, scalar_prefetch = 0 : i64, scratch_operands = 1 : i64, tpu.core_type = #tpu.core_type<tc>, window_params = [{transform_indices = @transform_0, window_bounds = array<i64: 1, 36, 64>}, {transform_indices = @transform_1, window_bounds = array<i64: 4, 36>}, {transform_indices = @transform_2, window_bounds = array<i64: 4, 1>}, {transform_indices = @transform_3, window_bounds = array<i64: 1, 4, 64>}]} {
    %c0_i32 = arith.constant 0 : i32
    %0 = arith.cmpi eq, %arg3, %c0_i32 : i32
    %1 = arith.extui %0 : i1 to i32
    %c0_i32_0 = arith.constant 0 : i32
    %2 = arith.cmpi ne, %1, %c0_i32_0 : i32
    scf.if %2 {
      %cst_11 = arith.constant 0.000000e+00 : f32
      %13 = vector.broadcast %cst_11 : f32 to vector<4x64xf32>
      %c0_12 = arith.constant 0 : index
      %c0_13 = arith.constant 0 : index
      %14 = vector.load %arg8[%c0_12, %c0_13] : memref<4x64xf32, #tpu.memory_space<vmem>>, vector<4x64xf32>
      tpu.vector_store %arg8[%c0_12, %c0_13], %13 {strides = array<i32>} : memref<4x64xf32, #tpu.memory_space<vmem>>, vector<4x64xf32>,
    } else {
    }
    %c0 = arith.constant 0 : index
    %c0_1 = arith.constant 0 : index
    %3 = vector.load %arg8[%c0, %c0_1] : memref<4x64xf32, #tpu.memory_space<vmem>>, vector<4x64xf32>
    %c0_2 = arith.constant 0 : index
    %c0_3 = arith.constant 0 : index
    %4 = vector.load %arg5[%c0_2, %c0_3] : memref<4x36xbf16, #tpu.memory_space<vmem>>, vector<4x36xbf16>
    %c0_4 = arith.constant 0 : index
    %c0_5 = arith.constant 0 : index
    %c0_6 = arith.constant 0 : index
    %5 = vector.load %arg4[%c0_4, %c0_5, %c0_6] : memref<1x36x64xbf16, #tpu.memory_space<vmem>>, vector<1x36x64xbf16>
    %6 = vector.shape_cast %5 : vector<1x36x64xbf16> to vector<36x64xbf16>
    %cst = arith.constant dense<0.000000e+00> : vector<4x64xf32>
    %7 = tpu.matmul %4, %6, %cst {dimension_numbers = #tpu.dot_dimension_numbers<[1], [0], [0], [1], [0, 0, 1, 1], [], []>} : vector<4x36xbf16>, vector<36x64xbf16>, vector<4x64xf32> -> vector<4x64xf32>
    %8 = arith.addf %3, %7 : vector<4x64xf32>
    %c0_7 = arith.constant 0 : index
    %c0_8 = arith.constant 0 : index
    %9 = vector.load %arg8[%c0_7, %c0_8] : memref<4x64xf32, #tpu.memory_space<vmem>>, vector<4x64xf32>
    tpu.vector_store %arg8[%c0_7, %c0_8], %8 {strides = array<i32>} : memref<4x64xf32, #tpu.memory_space<vmem>>, vector<4x64xf32>,
    %c0_i32_9 = arith.constant 0 : i32
    %10 = arith.cmpi eq, %arg3, %c0_i32_9 : i32
    %11 = arith.extui %10 : i1 to i32
    %c0_i32_10 = arith.constant 0 : i32
    %12 = arith.cmpi ne, %11, %c0_i32_10 : i32
    scf.if %12 {
      %c0_11 = arith.constant 0 : index
      %c0_12 = arith.constant 0 : index
      %13 = vector.load %arg8[%c0_11, %c0_12] : memref<4x64xf32, #tpu.memory_space<vmem>>, vector<4x64xf32>
      %c0_13 = arith.constant 0 : index
      %c0_14 = arith.constant 0 : index
      %14 = vector.load %arg6[%c0_13, %c0_14] : memref<4x1xf32, #tpu.memory_space<vmem>>, vector<4x1xf32>
      %15 = vector.broadcast %14 : vector<4x1xf32> to vector<4x64xf32>
      %16 = arith.addf %13, %15 : vector<4x64xf32>
      %c0_15 = arith.constant 0 : index
      %c0_16 = arith.constant 0 : index
      %c0_17 = arith.constant 0 : index
      %17 = vector.load %arg7[%c0_15, %c0_16, %c0_17] : memref<1x4x64xf32, #tpu.memory_space<vmem>>, vector<1x4x64xf32>
      %18 = vector.shape_cast %17 : vector<1x4x64xf32> to vector<4x64xf32>
      %19 = vector.shape_cast %16 : vector<4x64xf32> to vector<1x4x64xf32>
      tpu.vector_store %arg7[%c0_15, %c0_16, %c0_17], %19 {strides = array<i32>} : memref<1x4x64xf32, #tpu.memory_space<vmem>>, vector<1x4x64xf32>,
    } else {
    }
    return
  }
  func.func @transform_0(%arg0: i32, %arg1: i32, %arg2: i32, %arg3: i32) -> (i32, i32, i32) {
    %c0_i32 = arith.constant 0 : i32
    return %arg0, %arg3, %arg2 : i32, i32, i32
  }
  func.func @transform_1(%arg0: i32, %arg1: i32, %arg2: i32, %arg3: i32) -> (i32, i32) {
    %c0_i32 = arith.constant 0 : i32
    return %arg1, %arg3 : i32, i32
  }
  func.func @transform_2(%arg0: i32, %arg1: i32, %arg2: i32, %arg3: i32) -> (i32, i32) {
    %c0_i32 = arith.constant 0 : i32
    %c0_i32_0 = arith.constant 0 : i32
    return %arg1, %c0_i32 : i32, i32
  }
  func.func @transform_3(%arg0: i32, %arg1: i32, %arg2: i32, %arg3: i32) -> (i32, i32, i32) {
    %c0_i32 = arith.constant 0 : i32
    return %arg0, %arg1, %arg2 : i32, i32, i32
  }
}

</mosaic_0001>

<llo_original>
// kernel: tpu_custom_call.1
$region0: #{tpu_custom_call.1}
  #allocation0 [shape = 'u32[]', space=smem, size = 0x4, offset = 0x4, fixed_abs, tag = 'smem constant byte address 0x4 - core index']
  #allocation1 [shape = 'u32[144,128]{1,0:T(1,128)}', space=vmem, size = 0x12000, scoped, tag = 'internal scratch']
  #allocation2 [shape = 'f32[4,64]{1,0:T(4,128)}', space=vmem, size = 0x800, scoped, tag = 'scratch operand']
  %s0 = inlined_call_operand.vmem [shape: bf16[2,36,64], index: 0, kind: input, shape index: {}]
  %s1 = inlined_call_operand.vmem [shape: bf16[4,36], index: 1, kind: input, shape index: {}]
  %s2 = inlined_call_operand.vmem [shape: f32[4,1], index: 2, kind: input, shape index: {}]
  %s3 = inlined_call_operand.hbm [shape: f32[2,4,64], index: 3, kind: output, shape index: {}]
  %s4 = sld [smem:[#allocation0]]
  $region53: #{tpu_custom_call.1} parent=0
    _
  %s6 = ssub.s32 1, %s4
  %s7 = scalar_select 0, %s6, %s4
  $region1: #{tpu_custom_call.1} parent=0
    #allocation3 [shape = 'u8[4096]{0}', space=vmem, size = 0x1000, scoped, tag = 'output window, operand 0']
    #allocation4 [shape = 's32[2]{0}', space=sflag, size = 0x8, scoped, tag = 'scoped memory for tpu_custom_call.1']
    %8 = vsyncpa [#allocation4], 0
    %s9 = scalar_lea.sflag [#allocation4], 1
    %10 = vsyncpa %s9, 0
    loop: start=0, step=1, limit=4
    $region2: #{tpu_custom_call.1} parent=1 // loop_pre_header
      _
    $region3: #{tpu_custom_call.1} parent=1 // loop_header
      %s12 = sphi 0, %s16
      %p13 = scmp.ge.s32.totalorder %s12, 4
      %s19 = sphi 0, %s45
      %s20 = sphi 0, %s41
      %s21 = sphi 0, %s37
      %s22 = sphi 0, %s33
      %s23 = sphi 0, %s19
      %s24 = sphi 0, %s20
      %s25 = sphi 0, %s21
      %s26 = sphi 0, %s22
      %s27 = sphi 0, %s23
      %s28 = sphi 0, %s24
      %s29 = sphi 0, %s25
      %s30 = sphi 0, %s26
      %s52 = sphi 0, %s54
      %s55 = sphi 0, %s52
      %s56 = sphi 0, %s55
      %s72 = sphi 0, %s56
      %s80 = sphi 0, %s82
      %s83 = sphi 0, %s80
      %s84 = sphi 0, %s83
      %s100 = sphi 0, %s84
      %s106 = sphi 0, %s108
      %s109 = sphi 0, %s106
      %s110 = sphi 0, %s109
      %s126 = sphi 0, %s110
      %s136 = sphi 0, %s138
      %s139 = sphi 0, %s136
      %s140 = sphi 0, %s139
      %s156 = sphi 0, %s140
    $region4: #{tpu_custom_call.1} parent=1 // loop_header_branch
      %15 = sbr.rel (%p13) target = $region8
    $region5: #{tpu_custom_call.1} parent=1 // loop_body
      %s17 = ssub.s32 %s12, 1
      %s18 = ssub.s32 %s12, 2
      %s31 = sadd.s32 1, %s22
      %p32 = scmp.ge.s32.totalorder %s31, 1
      %s33 = scalar_select %p32, 0, %s31
      %s34 = sadd.s32 1, %s21
      %s35 = scalar_select %p32, %s34, %s21
      %p36 = scmp.ge.s32.totalorder %s35, 1
      %s37 = scalar_select %p36, 0, %s35
      %s38 = sadd.s32 1, %s20
      %s39 = scalar_select %p36, %s38, %s20
      %p40 = scmp.ge.s32.totalorder %s39, 1
      %s41 = scalar_select %p40, 0, %s39
      %s42 = sadd.s32 1, %s19
      %s43 = scalar_select %p40, %s42, %s19
      %p44 = scmp.ge.s32.totalorder %s43, 2
      %s45 = scalar_select %p44, 0, %s43
      %s46 = ssub.s32 %s19, %s45
      %s47 = ssub.s32 %s22, %s33
      %s48 = sor.u32 %s46, %s47
      %s49 = ssub.s32 %s21, %s37
      %s50 = sor.u32 %s48, %s49
      %p51 = scmp.eq.s32.totalorder %s50, 0
      %s53 = sadd.s32 %s52, 1
      %s54 = scalar_select %p51, %s52, %s53
      %p57 = pneg %p51
      %p58 = scmp.eq.s32.totalorder %s12, 1
      %p59 = por %p57, %p58
      %p60 = scmp.ne.s32.totalorder %s52, %s55
      %p61 = scmp.eq.s32.totalorder %s12, 0
      %p62 = por %p60, %p61
      %p63 = scmp.ne.s32.totalorder %s52, %s55
      %p64 = scmp.eq.s32.totalorder %s17, 1
      %p65 = por %p63, %p64
      %p66 = scmp.ne.s32.totalorder %s55, %s56
      %p67 = scmp.eq.s32.totalorder %s17, 0
      %p68 = por %p66, %p67
      %p69 = scmp.ne.s32.totalorder %s55, %s56
      %p70 = scmp.eq.s32.totalorder %s18, 1
      %p71 = por %p69, %p70
      %p73 = scmp.ne.s32.totalorder %s56, %s72
      %p74 = scmp.eq.s32.totalorder %s18, 0
      %p75 = por %p73, %p74
      %s76 = ssub.s32 %s20, %s41
      %s77 = ssub.s32 %s22, %s33
      %s78 = sor.u32 %s76, %s77
      %p79 = scmp.eq.s32.totalorder %s78, 0
      %s81 = sadd.s32 %s80, 1
      %s82 = scalar_select %p79, %s80, %s81
      %p85 = pneg %p79
      %p86 = scmp.eq.s32.totalorder %s12, 1
      %p87 = por %p85, %p86
      %p88 = scmp.ne.s32.totalorder %s80, %s83
      %p89 = scmp.eq.s32.totalorder %s12, 0
      %p90 = por %p88, %p89
      %p91 = scmp.ne.s32.totalorder %s80, %s83
      %p92 = scmp.eq.s32.totalorder %s17, 1
      %p93 = por %p91, %p92
      %p94 = scmp.ne.s32.totalorder %s83, %s84
      %p95 = scmp.eq.s32.totalorder %s17, 0
      %p96 = por %p94, %p95
      %p97 = scmp.ne.s32.totalorder %s83, %s84
      %p98 = scmp.eq.s32.totalorder %s18, 1
      %p99 = por %p97, %p98
      %p101 = scmp.ne.s32.totalorder %s84, %s100
      %p102 = scmp.eq.s32.totalorder %s18, 0
      %p103 = por %p101, %p102
      %s104 = ssub.s32 %s20, %s41
      %p105 = scmp.eq.s32.totalorder %s104, 0
      %s107 = sadd.s32 %s106, 1
      %s108 = scalar_select %p105, %s106, %s107
      %p111 = pneg %p105
      %p112 = scmp.eq.s32.totalorder %s12, 1
      %p113 = por %p111, %p112
      %p114 = scmp.ne.s32.totalorder %s106, %s109
      %p115 = scmp.eq.s32.totalorder %s12, 0
      %p116 = por %p114, %p115
      %p117 = scmp.ne.s32.totalorder %s106, %s109
      %p118 = scmp.eq.s32.totalorder %s17, 1
      %p119 = por %p117, %p118
      %p120 = scmp.ne.s32.totalorder %s109, %s110
      %p121 = scmp.eq.s32.totalorder %s17, 0
      %p122 = por %p120, %p121
      %p123 = scmp.ne.s32.totalorder %s109, %s110
      %p124 = scmp.eq.s32.totalorder %s18, 1
      %p125 = por %p123, %p124
      %p127 = scmp.ne.s32.totalorder %s110, %s126
      %p128 = scmp.eq.s32.totalorder %s18, 0
      %p129 = por %p127, %p128
      %s130 = ssub.s32 %s19, %s45
      %s131 = ssub.s32 %s20, %s41
      %s132 = sor.u32 %s130, %s131
      %s133 = ssub.s32 %s21, %s37
      %s134 = sor.u32 %s132, %s133
      %p135 = scmp.eq.s32.totalorder %s134, 0
      %s137 = sadd.s32 %s136, 1
      %s138 = scalar_select %p135, %s136, %s137
      %p141 = pneg %p135
      %p142 = scmp.eq.s32.totalorder %s12, 1
      %p143 = por %p141, %p142
      %p144 = scmp.ne.s32.totalorder %s136, %s139
      %p145 = scmp.eq.s32.totalorder %s12, 0
      %p146 = por %p144, %p145
      %p147 = scmp.ne.s32.totalorder %s136, %s139
      %p148 = scmp.eq.s32.totalorder %s17, 1
      %p149 = por %p147, %p148
      %p150 = scmp.ne.s32.totalorder %s139, %s140
      %p151 = scmp.eq.s32.totalorder %s17, 0
      %p152 = por %p150, %p151
      %p153 = scmp.ne.s32.totalorder %s139, %s140
      %p154 = scmp.eq.s32.totalorder %s18, 1
      %p155 = por %p153, %p154
      %p157 = scmp.ne.s32.totalorder %s140, %s156
      %p158 = scmp.eq.s32.totalorder %s18, 0
      %p159 = por %p157, %p158
      %p160 = scmp.le.s32.totalorder 1, %s12
      %p161 = scmp.lt.s32.totalorder %s12, 3
      %p162 = pnand %p160, %p161
      %p163 = pneg %p162
      // Predicated region
      $region9: #{tpu_custom_call.1} parent=5 // pred_check
        _
      $region10: #{tpu_custom_call.1} parent=5 // pred_check_branch
        %165 = sbr.rel (%p162) target = $region12
      $region11: #{tpu_custom_call.1} parent=5 // pred_region
        %s166 = ssub.s32 %s12, 1
        // Predicated region
        $region13: #{tpu_custom_call.1} parent=11 // pred_check
          %p167 = pneg %p96
        $region14: #{tpu_custom_call.1} parent=11 // pred_check_branch
          %169 = sbr.rel (%p167) target = $region16
        $region15: #{tpu_custom_call.1} parent=11 // pred_region
          %p170 = scmp.lt.s32.totalorder %s24, 0
          %s171 = scalar_select %p170, %s24, 0
          %p172 = scmp.lt.s32.totalorder %s26, 0
          %s173 = scalar_select %p172, %s26, 0
          %s174 = sadd.s32 %s173, %s171
          %s175 = smul.addr %s174, 2
          %s176 = scalar_lea.vmem %s1, %s175
        $region16: #{tpu_custom_call.1} parent=11 // pred_fallthru
          _
        // Predicated region
        $region17: #{tpu_custom_call.1} parent=11 // pred_check
          %p177 = pneg %p122
        $region18: #{tpu_custom_call.1} parent=11 // pred_check_branch
          %179 = sbr.rel (%p177) target = $region20
        $region19: #{tpu_custom_call.1} parent=11 // pred_region
          %p180 = scmp.lt.s32.totalorder %s24, 0
          %s181 = scalar_select %p180, %s24, 0
          %s182 = smul.addr %s181, 4
          %s183 = scalar_lea.vmem %s2, %s182
        $region20: #{tpu_custom_call.1} parent=11 // pred_fallthru
          _
      $region12: #{tpu_custom_call.1} parent=5 // pred_fallthru
        _
      %p184 = scmp.lt.s32.totalorder %s12, 2
      // Predicated region
      $region21: #{tpu_custom_call.1} parent=5 // pred_check
        %p185 = pneg %p184
      $region22: #{tpu_custom_call.1} parent=5 // pred_check_branch
        %187 = sbr.rel (%p185) target = $region24
      $region23: #{tpu_custom_call.1} parent=5 // pred_region
        // Predicated region
        $region25: #{tpu_custom_call.1} parent=23 // pred_check
          %p188 = pneg %p62
        $region26: #{tpu_custom_call.1} parent=23 // pred_check_branch
          %190 = sbr.rel (%p188) target = $region28
        $region27: #{tpu_custom_call.1} parent=23 // pred_region
          %s191 = smul.u32 5, %s22
          %p192 = scmp.lt.s32.totalorder %s19, 1
          %s193 = scalar_select %p192, %s19, 1
          %p194 = scmp.lt.s32.totalorder %s191, 4
          %s195 = scalar_select %p194, %s191, 4
          %p196 = scmp.lt.s32.totalorder %s21, 0
          %s197 = scalar_select %p196, %s21, 0
          %s198 = sadd.s32 %s197, %s195
          %s199 = smul.addr %s193, 5
          %s200 = sadd.s32 %s198, %s199
          %s201 = smul.addr %s200, 4
          %s202 = scalar_lea.vmem %s0, %s201
          %s203 = smul.u32 5, %s22
        $region28: #{tpu_custom_call.1} parent=23 // pred_fallthru
          _
      $region24: #{tpu_custom_call.1} parent=5 // pred_fallthru
        _
      %p204 = scmp.le.s32.totalorder 1, %s12
      %p205 = scmp.lt.s32.totalorder %s12, 3
      %p206 = pnand %p204, %p205
      %p207 = pneg %p206
      // Predicated region
      $region29: #{tpu_custom_call.1} parent=5 // pred_check
        _
      $region30: #{tpu_custom_call.1} parent=5 // pred_check_branch
        %209 = sbr.rel (%p206) target = $region32
      $region31: #{tpu_custom_call.1} parent=5 // pred_region
        %s210 = ssub.s32 %s12, 1
        %s211 = smul.u32 5, %s26
        %p212 = scmp.lt.s32.totalorder %s23, 1
        %s213 = scalar_select %p212, %s23, 1
        %p214 = scmp.lt.s32.totalorder %s211, 4
        %s215 = scalar_select %p214, %s211, 4
        %p216 = scmp.lt.s32.totalorder %s25, 0
        %s217 = scalar_select %p216, %s25, 0
        %s218 = sadd.s32 %s217, %s215
        %s219 = smul.addr %s213, 5
        %s220 = sadd.s32 %s218, %s219
        %s221 = smul.addr %s220, 4
        %s222 = scalar_lea.vmem %s0, %s221
        %p223 = pneg %p68
        %p224 = pneg %p65
        %p225 = scmp.lt.s32.totalorder %s24, 0
        %s226 = scalar_select %p225, %s24, 0
        %p227 = scmp.lt.s32.totalorder %s26, 0
        %s228 = scalar_select %p227, %s26, 0
        %s229 = sadd.s32 %s228, %s226
        %s230 = smul.addr %s229, 2
        %s231 = scalar_lea.vmem %s1, %s230
        %p232 = pneg %p96
        %p233 = pneg %p93
        %p234 = scmp.lt.s32.totalorder %s24, 0
        %s235 = scalar_select %p234, %s24, 0
        %s236 = smul.addr %s235, 4
        %s237 = scalar_lea.vmem %s2, %s236
        %p238 = pneg %p122
        %p239 = pneg %p119
        %p240 = pneg %p152
        %p241 = pneg %p149
        %s242 = sand.u32 %s139, 1
        %s243 = scalar_lea.sflag [#allocation4], %s242
        %s244 = sand.u32 %s139, 1
        %s245 = smul.addr %s244, 4
        %s246 = scalar_lea.vmem [#allocation3], %s245
        %s247 = smul.u32 5, %s26
        %p248 = scmp.lt.s32.totalorder %s23, 1
        %s249 = scalar_select %p248, %s23, 1
        %p250 = scmp.lt.s32.totalorder %s247, 4
        %s251 = scalar_select %p250, %s247, 4
        %p252 = scmp.lt.s32.totalorder %s25, 0
        %s253 = scalar_select %p252, %s25, 0
        %s254 = sadd.s32 %s253, %s251
        %s255 = smul.addr %s249, 5
        %s256 = sadd.s32 %s254, %s255
        %s257 = smul.addr %s256, 4
        %s258 = scalar_lea.vmem %s0, %s257
        %s259 = smul.u32 5, %s26
        %p260 = scmp.lt.s32.totalorder %s24, 0
        %s261 = scalar_select %p260, %s24, 0
        %p262 = scmp.lt.s32.totalorder %s26, 0
        %s263 = scalar_select %p262, %s26, 0
        %s264 = sadd.s32 %s263, %s261
        %s265 = smul.addr %s264, 2
        %s266 = scalar_lea.vmem %s1, %s265
        %p267 = scmp.lt.s32.totalorder %s24, 0
        %s268 = scalar_select %p267, %s24, 0
        %s269 = smul.addr %s268, 4
        %s270 = scalar_lea.vmem %s2, %s269
        %p272 = scmp.eq.s32.totalorder %s26, 0
        // Predicated region
        $region33: #{tpu_custom_call.1} parent=31 // pred_check
          %p273 = pneg %p272
        $region34: #{tpu_custom_call.1} parent=31 // pred_check_branch
          %275 = sbr.rel (%p273) target = $region36
        $region35: #{tpu_custom_call.1} parent=31 // pred_region
          %vm276 = vcmask 519168
          %277 = vst.msk [vmem:[#allocation2] sm:$0xf] %vm276, 0.0
        $region36: #{tpu_custom_call.1} parent=31 // pred_fallthru
          _
        %v278 = vld [vmem:[#allocation2] sm:$0xf]
        %v279 = vld [vmem:[%s266] sm:$0x3]
        %v280 = vld [vmem:[%s258] sm:$0xf]
        %v281 = vld [vmem:[%s258 + $0x4] sm:$0xf]
        %v282 = vld [vmem:[%s258 + $0x8] sm:$0xf]
        %v283 = vld [vmem:[%s258 + $0xc] sm:$0xf]
        %v284 = vld [vmem:[%s258 + $0x10] sm:$0x3]
        %v290 = vunpack.c.l.b16 %v280
        %v291 = vunpack.c.l.b16 %v281
        %v292 = vunpack.c.l.b16 %v282
        %v293 = vunpack.c.l.b16 %v283
        %v294 = vunpack.c.l.b16 %v284
        %v295 = vpack.c.b16 %v291, %v290
        %v296 = vpack.c.b16 %v293, %v292
        %v297 = vpack.c.b16 %v294, %v294
        %vm300 = vcmask 293888
        %v302 = vsel %vm300, %v279, 0
        %vm304 = vcmask 1041408
        %v306 = vsel %vm304, %v297, 0
        %308 = vmatprep.subr.bf16.mxu0 0
        %309 = vmatpush1.bf16.msra.mxu0 %v295
        %310 = vmatprep.subr.bf16.mxu0 0
        %311 = vmatpush1.bf16.msra.mxu0 %v296
        %312 = vmatprep.subr.bf16.mxu0 0
        %313 = vmatpush1.bf16.msra.mxu0 %v306
        %314 = vmatprep.subr.bf16.mxu0 0
        %315 = vmatpush1.bf16.msra.mxu0 0
        %316 = vmatprep.subr.bf16.mxu0 0
        %317 = vmatpush1.bf16.msra.mxu0 0
        %318 = vmatprep.subr.bf16.mxu0 0
        %319 = vmatpush1.bf16.msra.mxu0 0
        %320 = vmatprep.subr.bf16.mxu0 0
        %321 = vmatpush1.bf16.msra.mxu0 0
        %322 = vmatprep.subr.bf16.mxu0 0
        %323 = vmatpush1.bf16.msra.mxu0 0
        %324 = vmatprep.subr.bf16.mxu0 0
        %325 = vmatpush1.bf16.msra.mxu0 0
        %326 = vmatprep.subr.bf16.mxu0 0
        %327 = vmatpush1.bf16.msra.mxu0 0
        %328 = vmatprep.subr.bf16.mxu0 0
        %329 = vmatpush1.bf16.msra.mxu0 0
        %330 = vmatprep.subr.bf16.mxu0 0
        %331 = vmatpush1.bf16.msra.mxu0 0
        %332 = vmatprep.subr.bf16.mxu0 0
        %333 = vmatpush1.bf16.msra.mxu0 0
        %334 = vmatprep.subr.bf16.mxu0 0
        %335 = vmatpush1.bf16.msra.mxu0 0
        %336 = vmatprep.subr.bf16.mxu0 0
        %337 = vmatpush1.bf16.msra.mxu0 0
        %338 = vmatprep.subr.bf16.mxu0 0
        %339 = vmatpush1.bf16.msra.mxu0 0
        %340 = vmatprep.mubr.bf16.mxu0 0
        %341 = vmatmul.mubr.bf16.gmra.mrb[0].mxu0 %v302
        %v342 = vpop.f32.mrb[0].mxu0
        %v343 = vadd.f32 0.0, %v342
        %v344 = vpop.f32.mrb[0].mxu0
        %v345 = vpop.f32.mrb[0].mxu0
        %v346 = vpop.f32.mrb[0].mxu0
        %347 = vdwg.mxu0
        %v348 = vadd.f32 %v278, %v343
        %vm349 = vcmask 519168
        %350 = vst.msk [vmem:[#allocation2] sm:$0xf] %vm349, %v348
        // Predicated region
        $region37: #{tpu_custom_call.1} parent=31 // pred_check
          %p351 = pneg %p272
        $region38: #{tpu_custom_call.1} parent=31 // pred_check_branch
          %353 = sbr.rel (%p351) target = $region40
        $region39: #{tpu_custom_call.1} parent=31 // pred_region
          %v354 = vld [vmem:[#allocation2] sm:$0xf]
          %v355 = vld [vmem:[%s270] sm:$0xf]
          %357 = vset.pattern.permute.xlu0 0
          %358 = vperm.xlu0 %357, %v355
          %v359 = vpop.permute.xlu0 %358
          %v361 = vadd.f32 %v354, %v359
          %362 = vst.msk [vmem:[%s246] sm:$0xf] %vm349, %v361
        $region40: #{tpu_custom_call.1} parent=31 // pred_fallthru
          _
        %s363 = sand.u32 %s139, 1
        %s364 = scalar_lea.sflag [#allocation4], %s363
        %s365 = sand.u32 %s139, 1
        %s366 = smul.addr %s365, 4
        %s367 = scalar_lea.vmem [#allocation3], %s366
        // Predicated region
        $region41: #{tpu_custom_call.1} parent=31 // pred_check
          %p368 = pneg %p149
        $region42: #{tpu_custom_call.1} parent=31 // pred_check_branch
          %370 = sbr.rel (%p368) target = $region44
        $region43: #{tpu_custom_call.1} parent=31 // pred_region
          %s372 = ssub.s32 64, 64
          %373 = vsyncadd %s364, %s372
          %s374 = sadd.s32 %s25, %s24
          %s375 = sadd.s32 %s374, %s23
          %s376 = smul.addr %s375, 64
          %s377 = scalar_lea.hbm %s3, %s376
          %s379 = sshll.u32 %s367, 4
          %s380 = int_to_ptr.vmem [resolvable:$true] %s379
          %382 = dma.vmem_to_hbm [thread:$0]  %s380, 64, %s377, %s364
        $region44: #{tpu_custom_call.1} parent=31 // pred_fallthru
          _
      $region32: #{tpu_custom_call.1} parent=5 // pred_fallthru
        _
      %p383 = scmp.le.s32.totalorder 2, %s12
      // Predicated region
      $region45: #{tpu_custom_call.1} parent=5 // pred_check
        %p384 = pneg %p383
      $region46: #{tpu_custom_call.1} parent=5 // pred_check_branch
        %386 = sbr.rel (%p384) target = $region48
      $region47: #{tpu_custom_call.1} parent=5 // pred_region
        %s387 = ssub.s32 %s12, 2
        // Predicated region
        $region49: #{tpu_custom_call.1} parent=47 // pred_check
          %p388 = pneg %p155
        $region50: #{tpu_custom_call.1} parent=47 // pred_check_branch
          %390 = sbr.rel (%p388) target = $region52
        $region51: #{tpu_custom_call.1} parent=47 // pred_region
          %s391 = sand.u32 %s140, 1
          %s392 = scalar_lea.sflag [#allocation4], %s391
          %s393 = sand.u32 %s140, 1
          %s394 = smul.addr %s393, 4
          %s395 = scalar_lea.vmem [#allocation3], %s394
          %396 = dma.done %s392, 64
        $region52: #{tpu_custom_call.1} parent=47 // pred_fallthru
          _
      $region48: #{tpu_custom_call.1} parent=5 // pred_fallthru
        _
    $region6: #{tpu_custom_call.1} parent=1 // loop_footer
      %s16 = sadd.s32 1, %s12
    $region7: #{tpu_custom_call.1} parent=1 // loop_footer_branch
      %11 = sbr.rel target = $region3
    $region8: #{tpu_custom_call.1} parent=1 // loop_exit
      _
    %397 = vsyncpa [#allocation4], 1
    %s398 = scalar_lea.sflag [#allocation4], 1
    %399 = vsyncpa %s398, 1

</llo_original>
